<compile_context>
chip_gen: v7x
topology: tpu7x:2x2x1
jax: 0.10.0
libtpu: 0.0.40
codegen_flags: <defaults>
</compile_context>

<pallas_src>
import functools
import math

import jax
import jax.numpy as jnp
from jax.experimental import pallas as pl
from jax.experimental.pallas import tpu as pltpu

_LANE = 128
_TARGET_TILE_BYTES = 2 * 1024 * 1024  # per-buffer tile size target


def _satlu_kernel(lower, upper, x_ref, o_ref):
    # Elementwise saturation on the VPU: clip(x, lower, upper).
    x = x_ref[...]
    lo = jnp.asarray(lower, x.dtype)
    hi = jnp.asarray(upper, x.dtype)
    o_ref[...] = jnp.minimum(jnp.maximum(x, lo), hi)


def _round_up(a, b):
    return ((a + b - 1) // b) * b


def satlu(x, lower=0.0, upper=1.0):
    """SatLU forward: hardtanh(x, lower, upper). Works for any input shape."""
    orig_shape = x.shape
    dtype = x.dtype
    total = math.prod(orig_shape)

    itemsize = jnp.dtype(dtype).itemsize
    # Sub-32-bit dtypes pack along sublanes: 8 rows (f32), 16 (bf16), 32 (int8).
    sublane = {4: 8, 2: 16, 1: 32}.get(itemsize, 8)

    # Lane-dense slab width: a multiple of 128, capped at 1024.
    cols = min(1024, _round_up(max(total, 1), _LANE))
    rows = pl.cdiv(max(total, 1), cols)

    # Row-tile sized so one buffer is ~2 MiB, rounded to the sublane packing.
    tile_rows = max(sublane,
                    (_TARGET_TILE_BYTES // (cols * itemsize)) // sublane * sublane)
    tile_rows = min(tile_rows, _round_up(rows, sublane))

    padded_rows = _round_up(rows, tile_rows)
    padded_total = padded_rows * cols

    x_flat = jnp.ravel(x)
    if padded_total != total:
        x_flat = jnp.pad(x_flat, (0, padded_total - total))
    x2d = x_flat.reshape(padded_rows, cols)

    grid = (padded_rows // tile_rows,)

    out2d = pl.pallas_call(
        functools.partial(_satlu_kernel, lower, upper),
        out_shape=jax.ShapeDtypeStruct((padded_rows, cols), dtype),
        grid=grid,
        in_specs=[pl.BlockSpec((tile_rows, cols), lambda i: (i, 0))],
        out_specs=pl.BlockSpec((tile_rows, cols), lambda i: (i, 0)),
        input_output_aliases={0: 0},
        compiler_params=pltpu.CompilerParams(
            dimension_semantics=("parallel",)),
        cost_estimate=pl.CostEstimate(
            flops=2 * padded_total,
            transcendentals=0,
            bytes_accessed=2 * padded_total * itemsize),
    )(x2d)

    out_flat = out2d.reshape(-1)
    if padded_total != total:
        out_flat = out_flat[:total]
    return out_flat.reshape(orig_shape)


if __name__ == "__main__":
    key = jax.random.PRNGKey(0)

    # Case 1: small NCHW f32 input, values in [-2, 3] so clamping is exercised.
    x = jax.random.uniform(key, (2, 4, 16, 16), dtype=jnp.float32,
                           minval=-2.0, maxval=3.0)
    out = jax.block_until_ready(satlu(x, lower=0.0, upper=1.0))
    ref = jnp.clip(x, 0.0, 1.0)
    assert out.shape == x.shape and out.dtype == x.dtype
    assert jnp.allclose(out, ref), "f32 mismatch vs reference"

    # Case 2: awkward (non-128-multiple) bf16 shape to exercise the pad/retile
    # path and the dtype-aware sublane alignment.
    key2 = jax.random.PRNGKey(0)
    xb = jax.random.uniform(key2, (2, 3, 7, 9), dtype=jnp.bfloat16,
                            minval=-2.0, maxval=3.0)
    outb = jax.block_until_ready(satlu(xb, lower=0.0, upper=1.0))
    refb = jnp.clip(xb, jnp.bfloat16(0.0), jnp.bfloat16(1.0))
    assert outb.shape == xb.shape and outb.dtype == xb.dtype
    assert jnp.allclose(outb.astype(jnp.float32), refb.astype(jnp.float32)), \
        "bf16 mismatch vs reference"

    print("KERNEL_OK")
</pallas_src>

<mosaic_0001>
module attributes {stable_mosaic.version = 11 : i64} {
  func.func @_satlu_kernel(%arg0: i32, %arg1: memref<8x1024xf32, #tpu.memory_space<vmem>>, %arg2: memref<8x1024xf32, #tpu.memory_space<vmem>>) attributes {dimension_semantics = [#tpu.dimension_semantics<parallel>], iteration_bounds = array<i64: 1>, scalar_prefetch = 0 : i64, scratch_operands = 0 : i64, tpu.core_type = #tpu.core_type<tc>, window_params = [{transform_indices = @transform_0, window_bounds = array<i64: 8, 1024>}, {transform_indices = @transform_1, window_bounds = array<i64: 8, 1024>}]} {
    %c0 = arith.constant 0 : index
    %c0_0 = arith.constant 0 : index
    %0 = vector.load %arg1[%c0, %c0_0] : memref<8x1024xf32, #tpu.memory_space<vmem>>, vector<8x1024xf32>
    %cst = arith.constant 0.000000e+00 : f32
    %1 = vector.broadcast %cst : f32 to vector<8x1024xf32>
    %2 = arith.maximumf %0, %1 : vector<8x1024xf32>
    %cst_1 = arith.constant 1.000000e+00 : f32
    %3 = vector.broadcast %cst_1 : f32 to vector<8x1024xf32>
    %4 = arith.minimumf %2, %3 : vector<8x1024xf32>
    %c0_2 = arith.constant 0 : index
    %c0_3 = arith.constant 0 : index
    %5 = vector.load %arg2[%c0_2, %c0_3] : memref<8x1024xf32, #tpu.memory_space<vmem>>, vector<8x1024xf32>
    tpu.vector_store %arg2[%c0_2, %c0_3], %4 {strides = array<i32>} : memref<8x1024xf32, #tpu.memory_space<vmem>>, vector<8x1024xf32>,
    return
  }
  func.func @transform_0(%arg0: i32) -> (i32, i32) {
    %c0_i32 = arith.constant 0 : i32
    %c0_i32_0 = arith.constant 0 : i32
    return %arg0, %c0_i32 : i32, i32
  }
  func.func @transform_1(%arg0: i32) -> (i32, i32) {
    %c0_i32 = arith.constant 0 : i32
    %c0_i32_0 = arith.constant 0 : i32
    return %arg0, %c0_i32 : i32, i32
  }
}

</mosaic_0001>

<llo_original>
// kernel: tpu_custom_call.1
$region0: #{tpu_custom_call.1}
  #allocation0 [shape = 'u32[]', space=smem, size = 0x4, offset = 0x4, fixed_abs, tag = 'smem constant byte address 0x4 - core index']
  #allocation1 [shape = 'u32[144,128]{1,0:T(1,128)}', space=vmem, size = 0x12000, scoped, tag = 'internal scratch']
  %s0 = inlined_call_operand.hbm [shape: f32[8,1024], index: 0, kind: input, shape index: {}, may-alias: {0,1}]
  %s1 = inlined_call_operand.hbm [shape: f32[8,1024], index: 1, kind: output, shape index: {}, may-alias: {0,1}]
  %s2 = sld [smem:[#allocation0]]
  $region18: #{tpu_custom_call.1} parent=0
    _
  %s4 = ssub.s32 1, %s2
  %s5 = scalar_select 0, %s4, %s2
  $region1: #{tpu_custom_call.1} parent=0
    #allocation2 [shape = 'u8[32768]{0}', space=vmem, size = 0x8000, scoped, tag = 'input window, operand 0, single buffered']
    #allocation3 [shape = 's32[1]{0}', space=sflag, size = 0x4, scoped, tag = 'scoped memory for tpu_custom_call.1']
    #allocation4 [shape = 's32[1]{0}', space=sflag, size = 0x4, scoped, tag = 'scoped memory for tpu_custom_call.1']
    #allocation5 [shape = 'u8[32768]{0}', space=vmem, size = 0x8000, scoped, tag = 'output window, operand 0, single buffered']
    %6 = vsyncpa [#allocation3], 0
    %7 = vsyncpa [#allocation4], 0
    // Predicated region
    $region2: #{tpu_custom_call.1} parent=1 // pred_check
      _
    $region3: #{tpu_custom_call.1} parent=1 // pred_check_branch
      %9 = sbr.rel (0) target = $region5
    $region4: #{tpu_custom_call.1} parent=1 // pred_region
      %s11 = ssub.s32 1024, 1024
      %12 = vsyncadd [#allocation3], %s11
      %s14 = sshll.u32 [#allocation2], 4
      %s15 = int_to_ptr.vmem [resolvable:$true] %s14
      %17 = dma.hbm_to_vmem [thread:$0]  %s0, 1024, %s15, [#allocation3]
    $region5: #{tpu_custom_call.1} parent=1 // pred_fallthru
      _
    // Predicated region
    $region6: #{tpu_custom_call.1} parent=1 // pred_check
      _
    $region7: #{tpu_custom_call.1} parent=1 // pred_check_branch
      %19 = sbr.rel (0) target = $region9
    $region8: #{tpu_custom_call.1} parent=1 // pred_region
      %20 = dma.done [#allocation3], 1024
    $region9: #{tpu_custom_call.1} parent=1 // pred_fallthru
      _
    %v21 = vld [vmem:[#allocation2] sm:$0xff]
    %v22 = vld [vmem:[#allocation2 + $0x8] sm:$0xff]
    %v23 = vld [vmem:[#allocation2 + $0x10] sm:$0xff]
    %v24 = vld [vmem:[#allocation2 + $0x18] sm:$0xff]
    %v25 = vld [vmem:[#allocation2 + $0x20] sm:$0xff]
    %v26 = vld [vmem:[#allocation2 + $0x28] sm:$0xff]
    %v27 = vld [vmem:[#allocation2 + $0x30] sm:$0xff]
    %v28 = vld [vmem:[#allocation2 + $0x38] sm:$0xff]
    %v29 = vmax.f32 %v21, 0.0
    %v30 = vmax.f32 %v22, 0.0
    %v31 = vmax.f32 %v23, 0.0
    %v32 = vmax.f32 %v24, 0.0
    %v33 = vmax.f32 %v25, 0.0
    %v34 = vmax.f32 %v26, 0.0
    %v35 = vmax.f32 %v27, 0.0
    %v36 = vmax.f32 %v28, 0.0
    %v37 = vmin.f32 %v29, 1.0
    %v38 = vmin.f32 %v30, 1.0
    %v39 = vmin.f32 %v31, 1.0
    %v40 = vmin.f32 %v32, 1.0
    %v41 = vmin.f32 %v33, 1.0
    %v42 = vmin.f32 %v34, 1.0
    %v43 = vmin.f32 %v35, 1.0
    %v44 = vmin.f32 %v36, 1.0
    %45 = vst [vmem:[#allocation5] sm:$0xff] %v37
    %46 = vst [vmem:[#allocation5 + $0x8] sm:$0xff] %v38
    %47 = vst [vmem:[#allocation5 + $0x10] sm:$0xff] %v39
    %48 = vst [vmem:[#allocation5 + $0x18] sm:$0xff] %v40
    %49 = vst [vmem:[#allocation5 + $0x20] sm:$0xff] %v41
    %50 = vst [vmem:[#allocation5 + $0x28] sm:$0xff] %v42
    %51 = vst [vmem:[#allocation5 + $0x30] sm:$0xff] %v43
    %52 = vst [vmem:[#allocation5 + $0x38] sm:$0xff] %v44
    // Predicated region
    $region10: #{tpu_custom_call.1} parent=1 // pred_check
      _
    $region11: #{tpu_custom_call.1} parent=1 // pred_check_branch
      %54 = sbr.rel (0) target = $region13
    $region12: #{tpu_custom_call.1} parent=1 // pred_region
      %s56 = ssub.s32 1024, 1024
      %57 = vsyncadd [#allocation4], %s56
      %s59 = sshll.u32 [#allocation5], 4
      %s60 = int_to_ptr.vmem [resolvable:$true] %s59
      %62 = dma.vmem_to_hbm [thread:$0]  %s60, 1024, %s1, [#allocation4]
    $region13: #{tpu_custom_call.1} parent=1 // pred_fallthru
      _
    // Predicated region
    $region14: #{tpu_custom_call.1} parent=1 // pred_check
      _
    $region15: #{tpu_custom_call.1} parent=1 // pred_check_branch
      %64 = sbr.rel (0) target = $region17
    $region16: #{tpu_custom_call.1} parent=1 // pred_region
      %65 = dma.done [#allocation4], 1024
    $region17: #{tpu_custom_call.1} parent=1 // pred_fallthru
      _
    %66 = vsyncpa [#allocation3], 1
    %67 = vsyncpa [#allocation4], 1

</llo_original>
